<compile_context>
chip_gen: v7x
topology: tpu7x:2x2x1
jax: 0.10.0
libtpu: 0.0.40
codegen_flags: <defaults>
</compile_context>

<pallas_src>
import jax
import jax.numpy as jnp
from jax.experimental import pallas as pl
from jax.experimental.pallas import tpu as pltpu

# Problem sizes (small, synthetic, consistent with the module's __init__).
VOCAB_SIZE = 256       # vocab_size
EMBED_DIM = 32         # embedding_dim
CONTEXT_SIZE = 4       # context_size
FLAT_DIM = CONTEXT_SIZE * EMBED_DIM  # 128


def _w2v_kernel(idx_ref, emb_hbm, wt_ref, b_ref, out_ref, rows, sem):
    """idx_ref: SMEM (C,) int32 token ids (scalar prefetch)
       emb_hbm: HBM  (V, E)   embedding table (memory_space=pl.ANY, manual DMA)
       wt_ref : VMEM (C*E, V) pre-transposed Linear weight (bf16)
       b_ref  : VMEM (1, V)   Linear bias (f32)
       out_ref: VMEM (1, V)   log-probabilities (f32)
       rows   : VMEM (C, E)   gathered embedding rows (scratch)
       sem    : DMA semaphores, shape (C,)
    """
    # Issue all C row gathers up front; each copies one (1, E) row from HBM.
    for i in range(CONTEXT_SIZE):
        tok = jnp.clip(idx_ref[i], 0, VOCAB_SIZE - 1)       # guard untrusted ids
        pltpu.make_async_copy(emb_hbm.at[pl.ds(tok, 1), :],
                              rows.at[pl.ds(i, 1), :],
                              sem.at[i]).start()

    # (1, C*E) @ (C*E, V) as C partial K=E dots, f32 accumulate, bias folded in.
    acc = b_ref[...].astype(jnp.float32)                    # (1, V)
    for i in range(CONTEXT_SIZE):                           # static unrolled loop
        pltpu.make_async_copy(emb_hbm.at[pl.ds(0, 1), :],
                              rows.at[pl.ds(i, 1), :],
                              sem.at[i]).wait()
        xi = rows[pl.ds(i, 1), :].astype(wt_ref.dtype)      # (1, E)  bf16
        wi = wt_ref[pl.ds(i * EMBED_DIM, EMBED_DIM), :]     # (E, V)  static sublane slice
        acc = acc + jnp.dot(xi, wi, preferred_element_type=jnp.float32)

    # ReLU + log_softmax over the vocab (lane) axis, all in f32.
    z = jnp.maximum(acc, 0.0)                               # (1, V)
    m = jnp.max(z, axis=-1, keepdims=True)                  # (1, 1)
    lse = jnp.log(jnp.sum(jnp.exp(z - m), axis=-1, keepdims=True))
    out_ref[...] = (z - m - lse).astype(out_ref.dtype)


def prepare_params(weight, bias, weight_dtype=jnp.bfloat16):
    """One-time parameter prep (NOT part of the per-call forward path).

    PyTorch nn.Linear stores weight as (V, C*E); pre-transpose once to
    (C*E, V) and store in bf16 (halves the dominant HBM->VMEM transfer).
    Bias kept as an f32 (1, V) row.
    """
    return weight.T.astype(weight_dtype), bias.reshape(1, -1).astype(jnp.float32)


def word2vec_forward(indices, embeddings, wt, b2):
    """indices:    (C,)     int32 token ids
       embeddings: (V, E)   f32 embedding table (left in HBM; rows gathered by DMA)
       wt:         (C*E, V) bf16 pre-transposed Linear weight
       b2:         (1, V)   f32 bias
       returns:    (1, V)   f32 log-probabilities
    """
    V, E = embeddings.shape
    CE, V2 = wt.shape
    assert V2 == V and CE == FLAT_DIM and E == EMBED_DIM

    grid_spec = pltpu.PrefetchScalarGridSpec(
        num_scalar_prefetch=1,
        grid=(1,),
        in_specs=[
            pl.BlockSpec(memory_space=pl.ANY),               # embeddings: stay in HBM
            pl.BlockSpec((CE, V), lambda i, idx: (0, 0)),    # W^T (whole, one-shot)
            pl.BlockSpec((1, V), lambda i, idx: (0, 0)),     # bias
        ],
        out_specs=pl.BlockSpec((1, V), lambda i, idx: (0, 0)),
        scratch_shapes=[
            pltpu.VMEM((CONTEXT_SIZE, EMBED_DIM), embeddings.dtype),  # gathered rows
            pltpu.SemaphoreType.DMA((CONTEXT_SIZE,)),
        ],
    )

    return pl.pallas_call(
        _w2v_kernel,
        out_shape=jax.ShapeDtypeStruct((1, V), jnp.float32),
        grid_spec=grid_spec,
        compiler_params=pltpu.CompilerParams(
            dimension_semantics=("arbitrary",)),
    )(indices.astype(jnp.int32), embeddings, wt, b2)


def word2vec_reference(indices, embeddings, wt, b2):
    """Pure-JAX reference using the same (bf16-weight, f32-accumulate) math."""
    x = embeddings[indices].reshape(1, -1).astype(wt.dtype).astype(jnp.float32)
    w = wt.astype(jnp.float32)
    out = jnp.maximum(
        jnp.dot(x, w, precision=jax.lax.Precision.HIGHEST) + b2, 0.0)
    m = jnp.max(out, axis=-1, keepdims=True)
    return out - m - jnp.log(jnp.sum(jnp.exp(out - m), axis=-1, keepdims=True))


if __name__ == "__main__":
    key = jax.random.PRNGKey(0)
    k_emb, k_w, k_b, k_idx = jax.random.split(key, 4)

    # Deterministic parameter init (shapes from Word2Vec.__init__).
    embeddings = jax.random.normal(k_emb, (VOCAB_SIZE, EMBED_DIM), jnp.float32)
    bound = 1.0 / jnp.sqrt(FLAT_DIM)
    weight = jax.random.uniform(k_w, (VOCAB_SIZE, FLAT_DIM), jnp.float32,
                                minval=-bound, maxval=bound)
    bias = jax.random.uniform(k_b, (VOCAB_SIZE,), jnp.float32,
                              minval=-bound, maxval=bound)

    # Context window of token ids (the module's `inputs`).
    indices = jax.random.randint(k_idx, (CONTEXT_SIZE,), 0, VOCAB_SIZE, jnp.int32)

    # One-time layout/dtype prep (constant across forward calls).
    wt, b2 = prepare_params(weight, bias)

    log_probs = jax.block_until_ready(word2vec_forward(indices, embeddings, wt, b2))
    ref = word2vec_reference(indices, embeddings, wt, b2)

    assert log_probs.shape == (1, VOCAB_SIZE)
    assert jnp.allclose(log_probs, ref, atol=1e-4, rtol=1e-4), \
        float(jnp.max(jnp.abs(log_probs - ref)))

    print("KERNEL_OK")
</pallas_src>

<mosaic_0001>
module attributes {stable_mosaic.version = 11 : i64} {
  func.func @_w2v_kernel(%arg0: i32, %arg1: memref<4xi32, #tpu.memory_space<smem>>, %arg2: memref<256x32xf32, #tpu.memory_space<any>>, %arg3: memref<128x256xbf16, #tpu.memory_space<vmem>>, %arg4: memref<1x256xf32, #tpu.memory_space<vmem>>, %arg5: memref<1x256xf32, #tpu.memory_space<vmem>>, %arg6: memref<4x32xf32, #tpu.memory_space<vmem>>, %arg7: memref<4x!tpu.dma_semaphore, #tpu.memory_space<semaphore_mem>>) attributes {dimension_semantics = [#tpu.dimension_semantics<arbitrary>], iteration_bounds = array<i64: 1>, scalar_prefetch = 1 : i64, scratch_operands = 2 : i64, tpu.core_type = #tpu.core_type<tc>, window_params = [{}, {pipeline_mode = #tpu.pipeline_mode<synchronous>, transform_indices = @transform_1, window_bounds = array<i64: 128, 256>}, {pipeline_mode = #tpu.pipeline_mode<synchronous>, transform_indices = @transform_2, window_bounds = array<i64: 1, 256>}, {pipeline_mode = #tpu.pipeline_mode<synchronous>, transform_indices = @transform_3, window_bounds = array<i64: 1, 256>}]} {
    %c0 = arith.constant 0 : index
    %0 = memref.load %arg1[%c0] : memref<4xi32, #tpu.memory_space<smem>>
    %c0_i32 = arith.constant 0 : i32
    %c255_i32 = arith.constant 255 : i32
    %1 = arith.maxsi %c0_i32, %0 : i32
    %2 = arith.minsi %c255_i32, %1 : i32
    %c0_i32_0 = arith.constant 0 : i32
    %c0_i32_1 = arith.constant 0 : i32
    %3 = tpu.memref_slice %arg2[%2, %c0_i32_1] : memref<256x32xf32, #tpu.memory_space<any>> -> memref<1x32xf32, #tpu.memory_space<any>>
    %c0_i32_2 = arith.constant 0 : i32
    %c0_i32_3 = arith.constant 0 : i32
    %4 = tpu.memref_slice %arg6[%c0_i32_2, %c0_i32_3] : memref<4x32xf32, #tpu.memory_space<vmem>> -> memref<1x32xf32, #tpu.memory_space<vmem>>
    %5 = tpu.memref_slice %arg7[%c0_i32_0] : memref<4x!tpu.dma_semaphore, #tpu.memory_space<semaphore_mem>> -> memref<1x!tpu.dma_semaphore, #tpu.memory_space<semaphore_mem>>
    %6 = tpu.memref_squeeze %5 : memref<1x!tpu.dma_semaphore, #tpu.memory_space<semaphore_mem>> -> memref<!tpu.dma_semaphore, #tpu.memory_space<semaphore_mem>>
    tpu.enqueue_dma source(%3 : memref<1x32xf32, #tpu.memory_space<any>>) target(%4 : memref<1x32xf32, #tpu.memory_space<vmem>>) target_semaphore(%6 : memref<!tpu.dma_semaphore, #tpu.memory_space<semaphore_mem>>)
    %c1 = arith.constant 1 : index
    %7 = memref.load %arg1[%c1] : memref<4xi32, #tpu.memory_space<smem>>
    %c0_i32_4 = arith.constant 0 : i32
    %c255_i32_5 = arith.constant 255 : i32
    %8 = arith.maxsi %c0_i32_4, %7 : i32
    %9 = arith.minsi %c255_i32_5, %8 : i32
    %c1_i32 = arith.constant 1 : i32
    %c0_i32_6 = arith.constant 0 : i32
    %10 = tpu.memref_slice %arg2[%9, %c0_i32_6] : memref<256x32xf32, #tpu.memory_space<any>> -> memref<1x32xf32, #tpu.memory_space<any>>
    %c1_i32_7 = arith.constant 1 : i32
    %c0_i32_8 = arith.constant 0 : i32
    %11 = tpu.memref_slice %arg6[%c1_i32_7, %c0_i32_8] : memref<4x32xf32, #tpu.memory_space<vmem>> -> memref<1x32xf32, #tpu.memory_space<vmem>>
    %12 = tpu.memref_slice %arg7[%c1_i32] : memref<4x!tpu.dma_semaphore, #tpu.memory_space<semaphore_mem>> -> memref<1x!tpu.dma_semaphore, #tpu.memory_space<semaphore_mem>>
    %13 = tpu.memref_squeeze %12 : memref<1x!tpu.dma_semaphore, #tpu.memory_space<semaphore_mem>> -> memref<!tpu.dma_semaphore, #tpu.memory_space<semaphore_mem>>
    tpu.enqueue_dma source(%10 : memref<1x32xf32, #tpu.memory_space<any>>) target(%11 : memref<1x32xf32, #tpu.memory_space<vmem>>) target_semaphore(%13 : memref<!tpu.dma_semaphore, #tpu.memory_space<semaphore_mem>>)
    %c2 = arith.constant 2 : index
    %14 = memref.load %arg1[%c2] : memref<4xi32, #tpu.memory_space<smem>>
    %c0_i32_9 = arith.constant 0 : i32
    %c255_i32_10 = arith.constant 255 : i32
    %15 = arith.maxsi %c0_i32_9, %14 : i32
    %16 = arith.minsi %c255_i32_10, %15 : i32
    %c2_i32 = arith.constant 2 : i32
    %c0_i32_11 = arith.constant 0 : i32
    %17 = tpu.memref_slice %arg2[%16, %c0_i32_11] : memref<256x32xf32, #tpu.memory_space<any>> -> memref<1x32xf32, #tpu.memory_space<any>>
    %c2_i32_12 = arith.constant 2 : i32
    %c0_i32_13 = arith.constant 0 : i32
    %18 = tpu.memref_slice %arg6[%c2_i32_12, %c0_i32_13] : memref<4x32xf32, #tpu.memory_space<vmem>> -> memref<1x32xf32, #tpu.memory_space<vmem>>
    %19 = tpu.memref_slice %arg7[%c2_i32] : memref<4x!tpu.dma_semaphore, #tpu.memory_space<semaphore_mem>> -> memref<1x!tpu.dma_semaphore, #tpu.memory_space<semaphore_mem>>
    %20 = tpu.memref_squeeze %19 : memref<1x!tpu.dma_semaphore, #tpu.memory_space<semaphore_mem>> -> memref<!tpu.dma_semaphore, #tpu.memory_space<semaphore_mem>>
    tpu.enqueue_dma source(%17 : memref<1x32xf32, #tpu.memory_space<any>>) target(%18 : memref<1x32xf32, #tpu.memory_space<vmem>>) target_semaphore(%20 : memref<!tpu.dma_semaphore, #tpu.memory_space<semaphore_mem>>)
    %c3 = arith.constant 3 : index
    %21 = memref.load %arg1[%c3] : memref<4xi32, #tpu.memory_space<smem>>
    %c0_i32_14 = arith.constant 0 : i32
    %c255_i32_15 = arith.constant 255 : i32
    %22 = arith.maxsi %c0_i32_14, %21 : i32
    %23 = arith.minsi %c255_i32_15, %22 : i32
    %c3_i32 = arith.constant 3 : i32
    %c0_i32_16 = arith.constant 0 : i32
    %24 = tpu.memref_slice %arg2[%23, %c0_i32_16] : memref<256x32xf32, #tpu.memory_space<any>> -> memref<1x32xf32, #tpu.memory_space<any>>
    %c3_i32_17 = arith.constant 3 : i32
    %c0_i32_18 = arith.constant 0 : i32
    %25 = tpu.memref_slice %arg6[%c3_i32_17, %c0_i32_18] : memref<4x32xf32, #tpu.memory_space<vmem>> -> memref<1x32xf32, #tpu.memory_space<vmem>>
    %26 = tpu.memref_slice %arg7[%c3_i32] : memref<4x!tpu.dma_semaphore, #tpu.memory_space<semaphore_mem>> -> memref<1x!tpu.dma_semaphore, #tpu.memory_space<semaphore_mem>>
    %27 = tpu.memref_squeeze %26 : memref<1x!tpu.dma_semaphore, #tpu.memory_space<semaphore_mem>> -> memref<!tpu.dma_semaphore, #tpu.memory_space<semaphore_mem>>
    tpu.enqueue_dma source(%24 : memref<1x32xf32, #tpu.memory_space<any>>) target(%25 : memref<1x32xf32, #tpu.memory_space<vmem>>) target_semaphore(%27 : memref<!tpu.dma_semaphore, #tpu.memory_space<semaphore_mem>>)
    %c0_19 = arith.constant 0 : index
    %c0_20 = arith.constant 0 : index
    %28 = vector.load %arg4[%c0_19, %c0_20] : memref<1x256xf32, #tpu.memory_space<vmem>>, vector<1x256xf32>
    %c0_i32_21 = arith.constant 0 : i32
    %c0_i32_22 = arith.constant 0 : i32
    %c0_i32_23 = arith.constant 0 : i32
    %29 = tpu.memref_slice %arg2[%c0_i32_22, %c0_i32_23] : memref<256x32xf32, #tpu.memory_space<any>> -> memref<1x32xf32, #tpu.memory_space<any>>
    %c0_i32_24 = arith.constant 0 : i32
    %c0_i32_25 = arith.constant 0 : i32
    %30 = tpu.memref_slice %arg6[%c0_i32_24, %c0_i32_25] : memref<4x32xf32, #tpu.memory_space<vmem>> -> memref<1x32xf32, #tpu.memory_space<vmem>>
    %31 = tpu.memref_slice %arg7[%c0_i32_21] : memref<4x!tpu.dma_semaphore, #tpu.memory_space<semaphore_mem>> -> memref<1x!tpu.dma_semaphore, #tpu.memory_space<semaphore_mem>>
    %32 = tpu.memref_squeeze %31 : memref<1x!tpu.dma_semaphore, #tpu.memory_space<semaphore_mem>> -> memref<!tpu.dma_semaphore, #tpu.memory_space<semaphore_mem>>
    tpu.wait_dma2 semaphore(%32 : memref<!tpu.dma_semaphore, #tpu.memory_space<semaphore_mem>>) src(%29 : memref<1x32xf32, #tpu.memory_space<any>>) dst(%30 : memref<1x32xf32, #tpu.memory_space<vmem>>)
    %c0_26 = arith.constant 0 : index
    %c0_27 = arith.constant 0 : index
    %33 = vector.load %arg6[%c0_26, %c0_27] : memref<4x32xf32, #tpu.memory_space<vmem>>, vector<1x32xf32>
    %34 = arith.truncf %33 : vector<1x32xf32> to vector<1x32xbf16>
    %c0_28 = arith.constant 0 : index
    %c0_29 = arith.constant 0 : index
    %35 = vector.load %arg3[%c0_28, %c0_29] : memref<128x256xbf16, #tpu.memory_space<vmem>>, vector<32x256xbf16>
    %cst = arith.constant dense<0.000000e+00> : vector<1x256xf32>
    %36 = tpu.matmul %34, %35, %cst {dimension_numbers = #tpu.dot_dimension_numbers<[1], [0], [0], [1], [0, 0, 1, 1], [], []>} : vector<1x32xbf16>, vector<32x256xbf16>, vector<1x256xf32> -> vector<1x256xf32>
    %37 = arith.addf %28, %36 : vector<1x256xf32>
    %c1_i32_30 = arith.constant 1 : i32
    %c0_i32_31 = arith.constant 0 : i32
    %c0_i32_32 = arith.constant 0 : i32
    %38 = tpu.memref_slice %arg2[%c0_i32_31, %c0_i32_32] : memref<256x32xf32, #tpu.memory_space<any>> -> memref<1x32xf32, #tpu.memory_space<any>>
    %c1_i32_33 = arith.constant 1 : i32
    %c0_i32_34 = arith.constant 0 : i32
    %39 = tpu.memref_slice %arg6[%c1_i32_33, %c0_i32_34] : memref<4x32xf32, #tpu.memory_space<vmem>> -> memref<1x32xf32, #tpu.memory_space<vmem>>
    %40 = tpu.memref_slice %arg7[%c1_i32_30] : memref<4x!tpu.dma_semaphore, #tpu.memory_space<semaphore_mem>> -> memref<1x!tpu.dma_semaphore, #tpu.memory_space<semaphore_mem>>
    %41 = tpu.memref_squeeze %40 : memref<1x!tpu.dma_semaphore, #tpu.memory_space<semaphore_mem>> -> memref<!tpu.dma_semaphore, #tpu.memory_space<semaphore_mem>>
    tpu.wait_dma2 semaphore(%41 : memref<!tpu.dma_semaphore, #tpu.memory_space<semaphore_mem>>) src(%38 : memref<1x32xf32, #tpu.memory_space<any>>) dst(%39 : memref<1x32xf32, #tpu.memory_space<vmem>>)
    %c1_35 = arith.constant 1 : index
    %c0_36 = arith.constant 0 : index
    %42 = vector.load %arg6[%c1_35, %c0_36] : memref<4x32xf32, #tpu.memory_space<vmem>>, vector<1x32xf32>
    %43 = arith.truncf %42 : vector<1x32xf32> to vector<1x32xbf16>
    %c32 = arith.constant 32 : index
    %c0_37 = arith.constant 0 : index
    %44 = vector.load %arg3[%c32, %c0_37] : memref<128x256xbf16, #tpu.memory_space<vmem>>, vector<32x256xbf16>
    %cst_38 = arith.constant dense<0.000000e+00> : vector<1x256xf32>
    %45 = tpu.matmul %43, %44, %cst_38 {dimension_numbers = #tpu.dot_dimension_numbers<[1], [0], [0], [1], [0, 0, 1, 1], [], []>} : vector<1x32xbf16>, vector<32x256xbf16>, vector<1x256xf32> -> vector<1x256xf32>
    %46 = arith.addf %37, %45 : vector<1x256xf32>
    %c2_i32_39 = arith.constant 2 : i32
    %c0_i32_40 = arith.constant 0 : i32
    %c0_i32_41 = arith.constant 0 : i32
    %47 = tpu.memref_slice %arg2[%c0_i32_40, %c0_i32_41] : memref<256x32xf32, #tpu.memory_space<any>> -> memref<1x32xf32, #tpu.memory_space<any>>
    %c2_i32_42 = arith.constant 2 : i32
    %c0_i32_43 = arith.constant 0 : i32
    %48 = tpu.memref_slice %arg6[%c2_i32_42, %c0_i32_43] : memref<4x32xf32, #tpu.memory_space<vmem>> -> memref<1x32xf32, #tpu.memory_space<vmem>>
    %49 = tpu.memref_slice %arg7[%c2_i32_39] : memref<4x!tpu.dma_semaphore, #tpu.memory_space<semaphore_mem>> -> memref<1x!tpu.dma_semaphore, #tpu.memory_space<semaphore_mem>>
    %50 = tpu.memref_squeeze %49 : memref<1x!tpu.dma_semaphore, #tpu.memory_space<semaphore_mem>> -> memref<!tpu.dma_semaphore, #tpu.memory_space<semaphore_mem>>
    tpu.wait_dma2 semaphore(%50 : memref<!tpu.dma_semaphore, #tpu.memory_space<semaphore_mem>>) src(%47 : memref<1x32xf32, #tpu.memory_space<any>>) dst(%48 : memref<1x32xf32, #tpu.memory_space<vmem>>)
    %c2_44 = arith.constant 2 : index
    %c0_45 = arith.constant 0 : index
    %51 = vector.load %arg6[%c2_44, %c0_45] : memref<4x32xf32, #tpu.memory_space<vmem>>, vector<1x32xf32>
    %52 = arith.truncf %51 : vector<1x32xf32> to vector<1x32xbf16>
    %c64 = arith.constant 64 : index
    %c0_46 = arith.constant 0 : index
    %53 = vector.load %arg3[%c64, %c0_46] : memref<128x256xbf16, #tpu.memory_space<vmem>>, vector<32x256xbf16>
    %cst_47 = arith.constant dense<0.000000e+00> : vector<1x256xf32>
    %54 = tpu.matmul %52, %53, %cst_47 {dimension_numbers = #tpu.dot_dimension_numbers<[1], [0], [0], [1], [0, 0, 1, 1], [], []>} : vector<1x32xbf16>, vector<32x256xbf16>, vector<1x256xf32> -> vector<1x256xf32>
    %55 = arith.addf %46, %54 : vector<1x256xf32>
    %c3_i32_48 = arith.constant 3 : i32
    %c0_i32_49 = arith.constant 0 : i32
    %c0_i32_50 = arith.constant 0 : i32
    %56 = tpu.memref_slice %arg2[%c0_i32_49, %c0_i32_50] : memref<256x32xf32, #tpu.memory_space<any>> -> memref<1x32xf32, #tpu.memory_space<any>>
    %c3_i32_51 = arith.constant 3 : i32
    %c0_i32_52 = arith.constant 0 : i32
    %57 = tpu.memref_slice %arg6[%c3_i32_51, %c0_i32_52] : memref<4x32xf32, #tpu.memory_space<vmem>> -> memref<1x32xf32, #tpu.memory_space<vmem>>
    %58 = tpu.memref_slice %arg7[%c3_i32_48] : memref<4x!tpu.dma_semaphore, #tpu.memory_space<semaphore_mem>> -> memref<1x!tpu.dma_semaphore, #tpu.memory_space<semaphore_mem>>
    %59 = tpu.memref_squeeze %58 : memref<1x!tpu.dma_semaphore, #tpu.memory_space<semaphore_mem>> -> memref<!tpu.dma_semaphore, #tpu.memory_space<semaphore_mem>>
    tpu.wait_dma2 semaphore(%59 : memref<!tpu.dma_semaphore, #tpu.memory_space<semaphore_mem>>) src(%56 : memref<1x32xf32, #tpu.memory_space<any>>) dst(%57 : memref<1x32xf32, #tpu.memory_space<vmem>>)
    %c3_53 = arith.constant 3 : index
    %c0_54 = arith.constant 0 : index
    %60 = vector.load %arg6[%c3_53, %c0_54] : memref<4x32xf32, #tpu.memory_space<vmem>>, vector<1x32xf32>
    %61 = arith.truncf %60 : vector<1x32xf32> to vector<1x32xbf16>
    %c96 = arith.constant 96 : index
    %c0_55 = arith.constant 0 : index
    %62 = vector.load %arg3[%c96, %c0_55] : memref<128x256xbf16, #tpu.memory_space<vmem>>, vector<32x256xbf16>
    %cst_56 = arith.constant dense<0.000000e+00> : vector<1x256xf32>
    %63 = tpu.matmul %61, %62, %cst_56 {dimension_numbers = #tpu.dot_dimension_numbers<[1], [0], [0], [1], [0, 0, 1, 1], [], []>} : vector<1x32xbf16>, vector<32x256xbf16>, vector<1x256xf32> -> vector<1x256xf32>
    %64 = arith.addf %55, %63 : vector<1x256xf32>
    %cst_57 = arith.constant 0.000000e+00 : f32
    %65 = vector.broadcast %cst_57 : f32 to vector<1x256xf32>
    %66 = arith.maximumf %64, %65 : vector<1x256xf32>
    %cst_58 = arith.constant dense<0xFF800000> : vector<1xf32>
    %67 = vector.multi_reduction <maximumf>, %66, %cst_58 [1] : vector<1x256xf32> to vector<1xf32>
    %68 = vector.shape_cast %67 : vector<1xf32> to vector<1x1xf32>
    %69 = vector.broadcast %68 : vector<1x1xf32> to vector<1x256xf32>
    %70 = arith.subf %66, %69 : vector<1x256xf32>
    %71 = math.exp %70 : vector<1x256xf32>
    %cst_59 = arith.constant dense<0.000000e+00> : vector<1xf32>
    %72 = vector.multi_reduction <add>, %71, %cst_59 [1] : vector<1x256xf32> to vector<1xf32>
    %73 = vector.shape_cast %72 : vector<1xf32> to vector<1x1xf32>
    %74 = math.log %73 : vector<1x1xf32>
    %75 = vector.broadcast %68 : vector<1x1xf32> to vector<1x256xf32>
    %76 = arith.subf %66, %75 : vector<1x256xf32>
    %77 = vector.broadcast %74 : vector<1x1xf32> to vector<1x256xf32>
    %78 = arith.subf %76, %77 : vector<1x256xf32>
    %c0_60 = arith.constant 0 : index
    %c0_61 = arith.constant 0 : index
    %79 = vector.load %arg5[%c0_60, %c0_61] : memref<1x256xf32, #tpu.memory_space<vmem>>, vector<1x256xf32>
    tpu.vector_store %arg5[%c0_60, %c0_61], %78 {strides = array<i32>} : memref<1x256xf32, #tpu.memory_space<vmem>>, vector<1x256xf32>,
    return
  }
  func.func @transform_1(%arg0: i32, %arg1: memref<4xi32, #tpu.memory_space<smem>>) -> (i32, i32) {
    %c0_i32 = arith.constant 0 : i32
    %c0_i32_0 = arith.constant 0 : i32
    %c0_i32_1 = arith.constant 0 : i32
    return %c0_i32, %c0_i32_0 : i32, i32
  }
  func.func @transform_2(%arg0: i32, %arg1: memref<4xi32, #tpu.memory_space<smem>>) -> (i32, i32) {
    %c0_i32 = arith.constant 0 : i32
    %c0_i32_0 = arith.constant 0 : i32
    %c0_i32_1 = arith.constant 0 : i32
    return %c0_i32, %c0_i32_0 : i32, i32
  }
  func.func @transform_3(%arg0: i32, %arg1: memref<4xi32, #tpu.memory_space<smem>>) -> (i32, i32) {
    %c0_i32 = arith.constant 0 : i32
    %c0_i32_0 = arith.constant 0 : i32
    %c0_i32_1 = arith.constant 0 : i32
    return %c0_i32, %c0_i32_0 : i32, i32
  }
}

</mosaic_0001>

<llo_original>
// kernel: tpu_custom_call.1
$region0: #{tpu_custom_call.1}
  #allocation0 [shape = 'u32[]', space=smem, size = 0x4, offset = 0x4, fixed_abs, tag = 'smem constant byte address 0x4 - core index']
  #allocation1 [shape = 'u32[144,128]{1,0:T(1,128)}', space=vmem, size = 0x12000, scoped, tag = 'internal scratch']
  #allocation2 [shape = 'f32[4,32]{1,0:T(4,128)}', space=vmem, size = 0x800, scoped, tag = 'scratch operand']
  #allocation3 [shape = 's32[4]{0}', space=sflag, size = 0x10, scoped, tag = 'scratch operand']
  #allocation4 [shape = 's32[1]{0}', space=sflag, size = 0x4, scoped, tag = 'scoped memory for tpu_custom_call.1']
  #allocation5 [shape = 'u8[512]{0}', space=smem, size = 0x200, scoped, tag = 'prefetched SMEM operand 0']
  #allocation8 [shape = 's32[]', space=sflag, size = 0x4, offset = 0, fixed_abs, tag = 'sflag constant byte address 0x0 - dummy sync flag']
  #allocation9 [shape = 's32[]', space=sflag, size = 0x4, offset = 0, fixed_abs, tag = 'sflag constant byte address 0x0 - dummy sync flag']
  #allocation10 [shape = 's32[]', space=sflag, size = 0x4, offset = 0, fixed_abs, tag = 'sflag constant byte address 0x0 - dummy sync flag']
  #allocation11 [shape = 's32[]', space=sflag, size = 0x4, offset = 0, fixed_abs, tag = 'sflag constant byte address 0x0 - dummy sync flag']
  %s0 = inlined_call_operand.vmem [shape: s32[4], index: 0, kind: input, shape index: {}]
  %s1 = inlined_call_operand.vmem [shape: f32[256,32], index: 1, kind: input, shape index: {}]
  %s2 = inlined_call_operand.vmem [shape: bf16[128,256], index: 2, kind: input, shape index: {}]
  %s3 = inlined_call_operand.vmem [shape: f32[1,256], index: 3, kind: input, shape index: {}]
  %s4 = inlined_call_operand.hbm [shape: f32[1,256], index: 4, kind: output, shape index: {}]
  %s5 = sld [smem:[#allocation0]]
  $region138: #{tpu_custom_call.1} parent=0
    _
  %s7 = ssub.s32 1, %s5
  %s8 = scalar_select 0, %s7, %s5
  %s9 = sshll.u32 %s0, 4
  %s10 = int_to_ptr.vmem [resolvable:$true] %s9
  %12 = dma.vmem_to_smem %s10, 16, [#allocation5], [#allocation4]
  %13 = dma.done [#allocation4], 16
  %14 = sfence
  $region1: #{tpu_custom_call.1} parent=0
    #allocation6 [shape = 'u8[1024]{0}', space=vmem, size = 0x400, scoped, tag = 'output window, operand 0, single buffered']
    #allocation7 [shape = 's32[1]{0}', space=sflag, size = 0x4, scoped, tag = 'scoped memory for tpu_custom_call.1']
    %15 = vsyncpa [#allocation7], 0
    // Predicated region
    $region2: #{tpu_custom_call.1} parent=1 // pred_check
      _
    $region3: #{tpu_custom_call.1} parent=1 // pred_check_branch
      %17 = sbr.rel (0) target = $region5
    $region4: #{tpu_custom_call.1} parent=1 // pred_region
      _
    $region5: #{tpu_custom_call.1} parent=1 // pred_fallthru
      _
    // Predicated region
    $region6: #{tpu_custom_call.1} parent=1 // pred_check
      _
    $region7: #{tpu_custom_call.1} parent=1 // pred_check_branch
      %19 = sbr.rel (0) target = $region9
    $region8: #{tpu_custom_call.1} parent=1 // pred_region
      _
    $region9: #{tpu_custom_call.1} parent=1 // pred_fallthru
      _
    %s21 = sld [smem:[#allocation5]]
    %p22 = scmp.gt.s32.totalorder %s21, 0
    %s23 = scalar_select %p22, %s21, 0
    %p24 = scmp.lt.s32.totalorder %s23, 255
    %s25 = scalar_select %p24, %s23, 255
    %s26 = scalar_lea.vmem %s1, %s25
    %p28 = scmp.lt.u32.totalorder 1, 8
    %p29 = pneg %p28
    // Predicated region
    $region10: #{tpu_custom_call.1} parent=1 // pred_check
      _
    $region11: #{tpu_custom_call.1} parent=1 // pred_check_branch
      %31 = sbr.rel (%p28) target = $region13
    $region12: #{tpu_custom_call.1} parent=1 // pred_region
      %s46 = sand.u32 1, 7
      %p47 = scmp.eq.s32.totalorder %s46, 0
      %p48 = pneg %p47
      // Predicated region
      $region25: #{tpu_custom_call.1} parent=12 // pred_check
        _
      $region26: #{tpu_custom_call.1} parent=12 // pred_check_branch
        %50 = sbr.rel (%p47) target = $region28
      $region27: #{tpu_custom_call.1} parent=12 // pred_region
        %s51 = sand.u32 1, 7
        %s52 = ssub.s32 1, %s51
        %s53 = scalar_lea.vmem %s26, %s52
        %s54 = ssub.s32 1, %s51
        %s55 = scalar_lea.vmem [#allocation2], %s54
        %s56 = sshllo.u32 0, %s51
        loop: start=0, step=1, limit=1
        $region29: #{tpu_custom_call.1} parent=27 // loop_pre_header
          _
        $region30: #{tpu_custom_call.1} parent=27 // loop_header
          %s58 = sphi 0, %s62
          %p59 = scmp.ge.s32.totalorder %s58, 1
          %s63 = sphi %s53, %s53
          %s64 = sphi %s55, %s55
        $region31: #{tpu_custom_call.1} parent=27 // loop_header_branch
          %61 = sbr.rel (%p59) target = $region35
        $region32: #{tpu_custom_call.1} parent=27 // loop_body
          %v65 = vld [vmem:[%s63] sm:%s56]
          %66 = vst [vmem:[%s64] sm:%s56] %v65
        $region33: #{tpu_custom_call.1} parent=27 // loop_footer
          %s62 = sadd.s32 1, %s58
        $region34: #{tpu_custom_call.1} parent=27 // loop_footer_branch
          %57 = sbr.rel target = $region30
        $region35: #{tpu_custom_call.1} parent=27 // loop_exit
          _
      $region28: #{tpu_custom_call.1} parent=12 // pred_fallthru
        _
    $region13: #{tpu_custom_call.1} parent=1 // pred_fallthru
      _
    // Predicated region
    $region14: #{tpu_custom_call.1} parent=1 // pred_check
      %p32 = pneg %p28
    $region15: #{tpu_custom_call.1} parent=1 // pred_check_branch
      %34 = sbr.rel (%p32) target = $region17
    $region16: #{tpu_custom_call.1} parent=1 // pred_region
      %s35 = sshllo.u32 0, 1
      loop: start=0, step=1, limit=1
      $region18: #{tpu_custom_call.1} parent=16 // loop_pre_header
        _
      $region19: #{tpu_custom_call.1} parent=16 // loop_header
        %s37 = sphi 0, %s41
        %p38 = scmp.ge.s32.totalorder %s37, 1
        %s42 = sphi %s26, %s26
        %s43 = sphi [#allocation2], [#allocation2]
      $region20: #{tpu_custom_call.1} parent=16 // loop_header_branch
        %40 = sbr.rel (%p38) target = $region24
      $region21: #{tpu_custom_call.1} parent=16 // loop_body
        %v44 = vld [vmem:[%s42] sm:%s35]
        %45 = vst [vmem:[%s43] sm:%s35] %v44
      $region22: #{tpu_custom_call.1} parent=16 // loop_footer
        %s41 = sadd.s32 1, %s37
      $region23: #{tpu_custom_call.1} parent=16 // loop_footer_branch
        %36 = sbr.rel target = $region19
      $region24: #{tpu_custom_call.1} parent=16 // loop_exit
        _
    $region17: #{tpu_custom_call.1} parent=1 // pred_fallthru
      _
    // Predicated region
    $region36: #{tpu_custom_call.1} parent=1 // pred_check
      _
    $region37: #{tpu_custom_call.1} parent=1 // pred_check_branch
      %69 = sbr.rel (0) target = $region39
    $region38: #{tpu_custom_call.1} parent=1 // pred_region
      %70 = vsyncadd [#allocation3], 16
    $region39: #{tpu_custom_call.1} parent=1 // pred_fallthru
      _
    %s71 = sld [smem:[#allocation5 + $0x1]]
    %p72 = scmp.gt.s32.totalorder %s71, 0
    %s73 = scalar_select %p72, %s71, 0
    %p74 = scmp.lt.s32.totalorder %s73, 255
    %s75 = scalar_select %p74, %s73, 255
    %s76 = scalar_lea.vmem %s1, %s75
    %s77 = scalar_lea.vmem [#allocation2], 1
    %s78 = scalar_lea.sflag [#allocation3], 1
    %p80 = scmp.lt.u32.totalorder 1, 8
    %p81 = pneg %p80
    // Predicated region
    $region40: #{tpu_custom_call.1} parent=1 // pred_check
      _
    $region41: #{tpu_custom_call.1} parent=1 // pred_check_branch
      %83 = sbr.rel (%p80) target = $region43
    $region42: #{tpu_custom_call.1} parent=1 // pred_region
      %s98 = sand.u32 1, 7
      %p99 = scmp.eq.s32.totalorder %s98, 0
      %p100 = pneg %p99
      // Predicated region
      $region55: #{tpu_custom_call.1} parent=42 // pred_check
        _
      $region56: #{tpu_custom_call.1} parent=42 // pred_check_branch
        %102 = sbr.rel (%p99) target = $region58
      $region57: #{tpu_custom_call.1} parent=42 // pred_region
        %s103 = sand.u32 1, 7
        %s104 = ssub.s32 1, %s103
        %s105 = scalar_lea.vmem %s76, %s104
        %s106 = ssub.s32 1, %s103
        %s107 = scalar_lea.vmem %s77, %s106 [#allocation2]
        %s108 = sshllo.u32 0, %s103
        loop: start=0, step=1, limit=1
        $region59: #{tpu_custom_call.1} parent=57 // loop_pre_header
          _
        $region60: #{tpu_custom_call.1} parent=57 // loop_header
          %s110 = sphi 0, %s114
          %p111 = scmp.ge.s32.totalorder %s110, 1
          %s115 = sphi %s105, %s105
          %s116 = sphi %s107, %s107
        $region61: #{tpu_custom_call.1} parent=57 // loop_header_branch
          %113 = sbr.rel (%p111) target = $region65
        $region62: #{tpu_custom_call.1} parent=57 // loop_body
          %v117 = vld [vmem:[%s115] sm:%s108]
          %118 = vst [vmem:[%s116] sm:%s108] %v117
        $region63: #{tpu_custom_call.1} parent=57 // loop_footer
          %s114 = sadd.s32 1, %s110
        $region64: #{tpu_custom_call.1} parent=57 // loop_footer_branch
          %109 = sbr.rel target = $region60
        $region65: #{tpu_custom_call.1} parent=57 // loop_exit
          _
      $region58: #{tpu_custom_call.1} parent=42 // pred_fallthru
        _
    $region43: #{tpu_custom_call.1} parent=1 // pred_fallthru
      _
    // Predicated region
    $region44: #{tpu_custom_call.1} parent=1 // pred_check
      %p84 = pneg %p80
    $region45: #{tpu_custom_call.1} parent=1 // pred_check_branch
      %86 = sbr.rel (%p84) target = $region47
    $region46: #{tpu_custom_call.1} parent=1 // pred_region
      %s87 = sshllo.u32 0, 1
      loop: start=0, step=1, limit=1
      $region48: #{tpu_custom_call.1} parent=46 // loop_pre_header
        _
      $region49: #{tpu_custom_call.1} parent=46 // loop_header
        %s89 = sphi 0, %s93
        %p90 = scmp.ge.s32.totalorder %s89, 1
        %s94 = sphi %s76, %s76
        %s95 = sphi %s77, %s77
      $region50: #{tpu_custom_call.1} parent=46 // loop_header_branch
        %92 = sbr.rel (%p90) target = $region54
      $region51: #{tpu_custom_call.1} parent=46 // loop_body
        %v96 = vld [vmem:[%s94] sm:%s87]
        %97 = vst [vmem:[%s95] sm:%s87] %v96
      $region52: #{tpu_custom_call.1} parent=46 // loop_footer
        %s93 = sadd.s32 1, %s89
      $region53: #{tpu_custom_call.1} parent=46 // loop_footer_branch
        %88 = sbr.rel target = $region49
      $region54: #{tpu_custom_call.1} parent=46 // loop_exit
        _
    $region47: #{tpu_custom_call.1} parent=1 // pred_fallthru
      _
    // Predicated region
    $region66: #{tpu_custom_call.1} parent=1 // pred_check
      _
    $region67: #{tpu_custom_call.1} parent=1 // pred_check_branch
      %121 = sbr.rel (0) target = $region69
    $region68: #{tpu_custom_call.1} parent=1 // pred_region
      %122 = vsyncadd %s78, 16
    $region69: #{tpu_custom_call.1} parent=1 // pred_fallthru
      _
    %s123 = sld [smem:[#allocation5 + $0x2]]
    %p124 = scmp.gt.s32.totalorder %s123, 0
    %s125 = scalar_select %p124, %s123, 0
    %p126 = scmp.lt.s32.totalorder %s125, 255
    %s127 = scalar_select %p126, %s125, 255
    %s128 = scalar_lea.vmem %s1, %s127
    %s129 = scalar_lea.vmem [#allocation2], 2
    %s130 = scalar_lea.sflag [#allocation3], 2
    %p132 = scmp.lt.u32.totalorder 1, 8
    %p133 = pneg %p132
    // Predicated region
    $region70: #{tpu_custom_call.1} parent=1 // pred_check
      _
    $region71: #{tpu_custom_call.1} parent=1 // pred_check_branch
      %135 = sbr.rel (%p132) target = $region73
    $region72: #{tpu_custom_call.1} parent=1 // pred_region
      %s150 = sand.u32 1, 7
      %p151 = scmp.eq.s32.totalorder %s150, 0
      %p152 = pneg %p151
      // Predicated region
      $region85: #{tpu_custom_call.1} parent=72 // pred_check
        _
      $region86: #{tpu_custom_call.1} parent=72 // pred_check_branch
        %154 = sbr.rel (%p151) target = $region88
      $region87: #{tpu_custom_call.1} parent=72 // pred_region
        %s155 = sand.u32 1, 7
        %s156 = ssub.s32 1, %s155
        %s157 = scalar_lea.vmem %s128, %s156
        %s158 = ssub.s32 1, %s155
        %s159 = scalar_lea.vmem %s129, %s158 [#allocation2]
        %s160 = sshllo.u32 0, %s155
        loop: start=0, step=1, limit=1
        $region89: #{tpu_custom_call.1} parent=87 // loop_pre_header
          _
        $region90: #{tpu_custom_call.1} parent=87 // loop_header
          %s162 = sphi 0, %s166
          %p163 = scmp.ge.s32.totalorder %s162, 1
          %s167 = sphi %s157, %s157
          %s168 = sphi %s159, %s159
        $region91: #{tpu_custom_call.1} parent=87 // loop_header_branch
          %165 = sbr.rel (%p163) target = $region95
        $region92: #{tpu_custom_call.1} parent=87 // loop_body
          %v169 = vld [vmem:[%s167] sm:%s160]
          %170 = vst [vmem:[%s168] sm:%s160] %v169
        $region93: #{tpu_custom_call.1} parent=87 // loop_footer
          %s166 = sadd.s32 1, %s162
        $region94: #{tpu_custom_call.1} parent=87 // loop_footer_branch
          %161 = sbr.rel target = $region90
        $region95: #{tpu_custom_call.1} parent=87 // loop_exit
          _
      $region88: #{tpu_custom_call.1} parent=72 // pred_fallthru
        _
    $region73: #{tpu_custom_call.1} parent=1 // pred_fallthru
      _
    // Predicated region
    $region74: #{tpu_custom_call.1} parent=1 // pred_check
      %p136 = pneg %p132
    $region75: #{tpu_custom_call.1} parent=1 // pred_check_branch
      %138 = sbr.rel (%p136) target = $region77
    $region76: #{tpu_custom_call.1} parent=1 // pred_region
      %s139 = sshllo.u32 0, 1
      loop: start=0, step=1, limit=1
      $region78: #{tpu_custom_call.1} parent=76 // loop_pre_header
        _
      $region79: #{tpu_custom_call.1} parent=76 // loop_header
        %s141 = sphi 0, %s145
        %p142 = scmp.ge.s32.totalorder %s141, 1
        %s146 = sphi %s128, %s128
        %s147 = sphi %s129, %s129
      $region80: #{tpu_custom_call.1} parent=76 // loop_header_branch
        %144 = sbr.rel (%p142) target = $region84
      $region81: #{tpu_custom_call.1} parent=76 // loop_body
        %v148 = vld [vmem:[%s146] sm:%s139]
        %149 = vst [vmem:[%s147] sm:%s139] %v148
      $region82: #{tpu_custom_call.1} parent=76 // loop_footer
        %s145 = sadd.s32 1, %s141
      $region83: #{tpu_custom_call.1} parent=76 // loop_footer_branch
        %140 = sbr.rel target = $region79
      $region84: #{tpu_custom_call.1} parent=76 // loop_exit
        _
    $region77: #{tpu_custom_call.1} parent=1 // pred_fallthru
      _
    // Predicated region
    $region96: #{tpu_custom_call.1} parent=1 // pred_check
      _
    $region97: #{tpu_custom_call.1} parent=1 // pred_check_branch
      %173 = sbr.rel (0) target = $region99
    $region98: #{tpu_custom_call.1} parent=1 // pred_region
      %174 = vsyncadd %s130, 16
    $region99: #{tpu_custom_call.1} parent=1 // pred_fallthru
      _
    %s175 = sld [smem:[#allocation5 + $0x3]]
    %p176 = scmp.gt.s32.totalorder %s175, 0
    %s177 = scalar_select %p176, %s175, 0
    %p178 = scmp.lt.s32.totalorder %s177, 255
    %s179 = scalar_select %p178, %s177, 255
    %s180 = scalar_lea.vmem %s1, %s179
    %s181 = scalar_lea.vmem [#allocation2], 3
    %s182 = scalar_lea.sflag [#allocation3], 3
    %p184 = scmp.lt.u32.totalorder 1, 8
    %p185 = pneg %p184
    // Predicated region
    $region100: #{tpu_custom_call.1} parent=1 // pred_check
      _
    $region101: #{tpu_custom_call.1} parent=1 // pred_check_branch
      %187 = sbr.rel (%p184) target = $region103
    $region102: #{tpu_custom_call.1} parent=1 // pred_region
      %s202 = sand.u32 1, 7
      %p203 = scmp.eq.s32.totalorder %s202, 0
      %p204 = pneg %p203
      // Predicated region
      $region115: #{tpu_custom_call.1} parent=102 // pred_check
        _
      $region116: #{tpu_custom_call.1} parent=102 // pred_check_branch
        %206 = sbr.rel (%p203) target = $region118
      $region117: #{tpu_custom_call.1} parent=102 // pred_region
        %s207 = sand.u32 1, 7
        %s208 = ssub.s32 1, %s207
        %s209 = scalar_lea.vmem %s180, %s208
        %s210 = ssub.s32 1, %s207
        %s211 = scalar_lea.vmem %s181, %s210 [#allocation2]
        %s212 = sshllo.u32 0, %s207
        loop: start=0, step=1, limit=1
        $region119: #{tpu_custom_call.1} parent=117 // loop_pre_header
          _
        $region120: #{tpu_custom_call.1} parent=117 // loop_header
          %s214 = sphi 0, %s218
          %p215 = scmp.ge.s32.totalorder %s214, 1
          %s219 = sphi %s209, %s209
          %s220 = sphi %s211, %s211
        $region121: #{tpu_custom_call.1} parent=117 // loop_header_branch
          %217 = sbr.rel (%p215) target = $region125
        $region122: #{tpu_custom_call.1} parent=117 // loop_body
          %v221 = vld [vmem:[%s219] sm:%s212]
          %222 = vst [vmem:[%s220] sm:%s212] %v221
        $region123: #{tpu_custom_call.1} parent=117 // loop_footer
          %s218 = sadd.s32 1, %s214
        $region124: #{tpu_custom_call.1} parent=117 // loop_footer_branch
          %213 = sbr.rel target = $region120
        $region125: #{tpu_custom_call.1} parent=117 // loop_exit
          _
      $region118: #{tpu_custom_call.1} parent=102 // pred_fallthru
        _
    $region103: #{tpu_custom_call.1} parent=1 // pred_fallthru
      _
    // Predicated region
    $region104: #{tpu_custom_call.1} parent=1 // pred_check
      %p188 = pneg %p184
    $region105: #{tpu_custom_call.1} parent=1 // pred_check_branch
      %190 = sbr.rel (%p188) target = $region107
    $region106: #{tpu_custom_call.1} parent=1 // pred_region
      %s191 = sshllo.u32 0, 1
      loop: start=0, step=1, limit=1
      $region108: #{tpu_custom_call.1} parent=106 // loop_pre_header
        _
      $region109: #{tpu_custom_call.1} parent=106 // loop_header
        %s193 = sphi 0, %s197
        %p194 = scmp.ge.s32.totalorder %s193, 1
        %s198 = sphi %s180, %s180
        %s199 = sphi %s181, %s181
      $region110: #{tpu_custom_call.1} parent=106 // loop_header_branch
        %196 = sbr.rel (%p194) target = $region114
      $region111: #{tpu_custom_call.1} parent=106 // loop_body
        %v200 = vld [vmem:[%s198] sm:%s191]
        %201 = vst [vmem:[%s199] sm:%s191] %v200
      $region112: #{tpu_custom_call.1} parent=106 // loop_footer
        %s197 = sadd.s32 1, %s193
      $region113: #{tpu_custom_call.1} parent=106 // loop_footer_branch
        %192 = sbr.rel target = $region109
      $region114: #{tpu_custom_call.1} parent=106 // loop_exit
        _
    $region107: #{tpu_custom_call.1} parent=1 // pred_fallthru
      _
    // Predicated region
    $region126: #{tpu_custom_call.1} parent=1 // pred_check
      _
    $region127: #{tpu_custom_call.1} parent=1 // pred_check_branch
      %225 = sbr.rel (0) target = $region129
    $region128: #{tpu_custom_call.1} parent=1 // pred_region
      %226 = vsyncadd %s182, 16
    $region129: #{tpu_custom_call.1} parent=1 // pred_fallthru
      _
    %v227 = vld [vmem:[%s3] sm:$0x3]
    %s228 = smul.u32 1, 1
    %s229 = sshll.u32 %s228, 4
    %230 = dma.done [#allocation3], %s229
    %v231 = vld [vmem:[#allocation2] sm:$0x1]
    %v232 = vpack.c.bf16 %v231, %v231
    %v233 = vld [vmem:[%s2] sm:$0xff]
    %v234 = vld [vmem:[%s2 + $0x8] sm:$0xff]
    %v235 = vld [vmem:[%s2 + $0x10] sm:$0xff]
    %v236 = vld [vmem:[%s2 + $0x18] sm:$0xff]
    %v241 = vunpack.c.l.b16 %v233
    %v242 = vunpack.c.h.b16 %v233
    %v243 = vunpack.c.l.b16 %v234
    %v244 = vunpack.c.h.b16 %v234
    %v245 = vunpack.c.l.b16 %v235
    %v246 = vunpack.c.h.b16 %v235
    %v247 = vunpack.c.l.b16 %v236
    %v248 = vunpack.c.h.b16 %v236
    %v249 = vpack.c.b16 %v243, %v241
    %v250 = vpack.c.b16 %v244, %v242
    %v251 = vpack.c.b16 %v247, %v245
    %v252 = vpack.c.b16 %v248, %v246
    %vm257 = vcmask 261120
    %v259 = vsel %vm257, %v232, 0
    %261 = vmatprep.subr.bf16.mxu0 %v250
    %262 = vmatpush1.bf16.msra.mxu0 %v249
    %263 = vmatprep.subr.bf16.mxu0 %v252
    %264 = vmatpush1.bf16.msra.mxu0 %v251
    %265 = vmatprep.subr.bf16.mxu0 0
    %266 = vmatpush1.bf16.msra.mxu0 0
    %267 = vmatprep.subr.bf16.mxu0 0
    %268 = vmatpush1.bf16.msra.mxu0 0
    %269 = vmatprep.subr.bf16.mxu0 0
    %270 = vmatpush1.bf16.msra.mxu0 0
    %271 = vmatprep.subr.bf16.mxu0 0
    %272 = vmatpush1.bf16.msra.mxu0 0
    %273 = vmatprep.subr.bf16.mxu0 0
    %274 = vmatpush1.bf16.msra.mxu0 0
    %275 = vmatprep.subr.bf16.mxu0 0
    %276 = vmatpush1.bf16.msra.mxu0 0
    %277 = vmatprep.subr.bf16.mxu0 0
    %278 = vmatpush1.bf16.msra.mxu0 0
    %279 = vmatprep.subr.bf16.mxu0 0
    %280 = vmatpush1.bf16.msra.mxu0 0
    %281 = vmatprep.subr.bf16.mxu0 0
    %282 = vmatpush1.bf16.msra.mxu0 0
    %283 = vmatprep.subr.bf16.mxu0 0
    %284 = vmatpush1.bf16.msra.mxu0 0
    %285 = vmatprep.subr.bf16.mxu0 0
    %286 = vmatpush1.bf16.msra.mxu0 0
    %287 = vmatprep.subr.bf16.mxu0 0
    %288 = vmatpush1.bf16.msra.mxu0 0
    %289 = vmatprep.subr.bf16.mxu0 0
    %290 = vmatpush1.bf16.msra.mxu0 0
    %291 = vmatprep.subr.bf16.mxu0 0
    %292 = vmatpush1.bf16.msra.mxu0 0
    %293 = vmatprep.mubr.bf16.mxu0 0
    %294 = vmatmul.mubr.bf16.gmra.mrb[0].mxu0 %v259
    %v295 = vpop.f32.mrb[0].mxu0
    %v296 = vadd.f32 0.0, %v295
    %v297 = vpop.f32.mrb[0].mxu0
    %v298 = vadd.f32 0.0, %v297
    %v299 = vpop.f32.mrb[0].mxu0
    %v300 = vpop.f32.mrb[0].mxu0
    %301 = vdwg.mxu0
    %v304 = vcombine.low %v296, %v298
    %v306 = vunpack.c.l.s4 1966171168
    %v307 = vunpack.c.0.s8 %v306
    %v308 = vlaneseq
    %v309 = vshrl.u32 %v308, 7
    %v310 = vsub.s32 %v307, %v309
    %v311 = vrot.slane %v304, %v310
    %v313 = vunpack.c.l.s4 1966171168
    %v314 = vunpack.c.0.s8 %v313
    %v315 = vlaneseq
    %v316 = vshrl.u32 %v315, 7
    %v317 = vsub.s32 %v314, %v316
    %v318 = vrot.slane %v311, %v317
    %v320 = vadd.f32 %v227, %v318
    %s321 = sshll.u32 %s228, 4
    %322 = dma.done %s78, %s321
    %v323 = vld [vmem:[#allocation2 + $0x1] sm:$0x1]
    %v324 = vpack.c.bf16 %v323, %v323
    %v325 = vld [vmem:[%s2 + $0x20] sm:$0xff]
    %v326 = vld [vmem:[%s2 + $0x28] sm:$0xff]
    %v327 = vld [vmem:[%s2 + $0x30] sm:$0xff]
    %v328 = vld [vmem:[%s2 + $0x38] sm:$0xff]
    %v333 = vunpack.c.l.b16 %v325
    %v334 = vunpack.c.h.b16 %v325
    %v335 = vunpack.c.l.b16 %v326
    %v336 = vunpack.c.h.b16 %v326
    %v337 = vunpack.c.l.b16 %v327
    %v338 = vunpack.c.h.b16 %v327
    %v339 = vunpack.c.l.b16 %v328
    %v340 = vunpack.c.h.b16 %v328
    %v341 = vpack.c.b16 %v335, %v333
    %v342 = vpack.c.b16 %v336, %v334
    %v343 = vpack.c.b16 %v339, %v337
    %v344 = vpack.c.b16 %v340, %v338
    %v350 = vsel %vm257, %v324, 0
    %352 = vmatprep.subr.bf16.mxu0 %v342
    %353 = vmatpush1.bf16.msra.mxu0 %v341
    %354 = vmatprep.subr.bf16.mxu0 %v344
    %355 = vmatpush1.bf16.msra.mxu0 %v343
    %356 = vmatprep.subr.bf16.mxu0 0
    %357 = vmatpush1.bf16.msra.mxu0 0
    %358 = vmatprep.subr.bf16.mxu0 0
    %359 = vmatpush1.bf16.msra.mxu0 0
    %360 = vmatprep.subr.bf16.mxu0 0
    %361 = vmatpush1.bf16.msra.mxu0 0
    %362 = vmatprep.subr.bf16.mxu0 0
    %363 = vmatpush1.bf16.msra.mxu0 0
    %364 = vmatprep.subr.bf16.mxu0 0
    %365 = vmatpush1.bf16.msra.mxu0 0
    %366 = vmatprep.subr.bf16.mxu0 0
    %367 = vmatpush1.bf16.msra.mxu0 0
    %368 = vmatprep.subr.bf16.mxu0 0
    %369 = vmatpush1.bf16.msra.mxu0 0
    %370 = vmatprep.subr.bf16.mxu0 0
    %371 = vmatpush1.bf16.msra.mxu0 0
    %372 = vmatprep.subr.bf16.mxu0 0
    %373 = vmatpush1.bf16.msra.mxu0 0
    %374 = vmatprep.subr.bf16.mxu0 0
    %375 = vmatpush1.bf16.msra.mxu0 0
    %376 = vmatprep.subr.bf16.mxu0 0
    %377 = vmatpush1.bf16.msra.mxu0 0
    %378 = vmatprep.subr.bf16.mxu0 0
    %379 = vmatpush1.bf16.msra.mxu0 0
    %380 = vmatprep.subr.bf16.mxu0 0
    %381 = vmatpush1.bf16.msra.mxu0 0
    %382 = vmatprep.subr.bf16.mxu0 0
    %383 = vmatpush1.bf16.msra.mxu0 0
    %384 = vmatprep.mubr.bf16.mxu0 0
    %385 = vmatmul.mubr.bf16.gmra.mrb[0].mxu0 %v350
    %v386 = vpop.f32.mrb[0].mxu0
    %v387 = vadd.f32 0.0, %v386
    %v388 = vpop.f32.mrb[0].mxu0
    %v389 = vadd.f32 0.0, %v388
    %v390 = vpop.f32.mrb[0].mxu0
    %v391 = vpop.f32.mrb[0].mxu0
    %392 = vdwg.mxu0
    %v395 = vcombine.low %v387, %v389
    %v397 = vunpack.c.l.s4 1966171168
    %v398 = vunpack.c.0.s8 %v397
    %v399 = vlaneseq
    %v400 = vshrl.u32 %v399, 7
    %v401 = vsub.s32 %v398, %v400
    %v402 = vrot.slane %v395, %v401
    %v404 = vunpack.c.l.s4 1966171168
    %v405 = vunpack.c.0.s8 %v404
    %v406 = vlaneseq
    %v407 = vshrl.u32 %v406, 7
    %v408 = vsub.s32 %v405, %v407
    %v409 = vrot.slane %v402, %v408
    %v411 = vadd.f32 %v320, %v409
    %s412 = sshll.u32 %s228, 4
    %413 = dma.done %s130, %s412
    %v414 = vld [vmem:[#allocation2 + $0x2] sm:$0x1]
    %v415 = vpack.c.bf16 %v414, %v414
    %v416 = vld [vmem:[%s2 + $0x40] sm:$0xff]
    %v417 = vld [vmem:[%s2 + $0x48] sm:$0xff]
    %v418 = vld [vmem:[%s2 + $0x50] sm:$0xff]
    %v419 = vld [vmem:[%s2 + $0x58] sm:$0xff]
    %v424 = vunpack.c.l.b16 %v416
    %v425 = vunpack.c.h.b16 %v416
    %v426 = vunpack.c.l.b16 %v417
    %v427 = vunpack.c.h.b16 %v417
    %v428 = vunpack.c.l.b16 %v418
    %v429 = vunpack.c.h.b16 %v418
    %v430 = vunpack.c.l.b16 %v419
    %v431 = vunpack.c.h.b16 %v419
    %v432 = vpack.c.b16 %v426, %v424
    %v433 = vpack.c.b16 %v427, %v425
    %v434 = vpack.c.b16 %v430, %v428
    %v435 = vpack.c.b16 %v431, %v429
    %v441 = vsel %vm257, %v415, 0
    %443 = vmatprep.subr.bf16.mxu0 %v433
    %444 = vmatpush1.bf16.msra.mxu0 %v432
    %445 = vmatprep.subr.bf16.mxu0 %v435
    %446 = vmatpush1.bf16.msra.mxu0 %v434
    %447 = vmatprep.subr.bf16.mxu0 0
    %448 = vmatpush1.bf16.msra.mxu0 0
    %449 = vmatprep.subr.bf16.mxu0 0
    %450 = vmatpush1.bf16.msra.mxu0 0
    %451 = vmatprep.subr.bf16.mxu0 0
    %452 = vmatpush1.bf16.msra.mxu0 0
    %453 = vmatprep.subr.bf16.mxu0 0
    %454 = vmatpush1.bf16.msra.mxu0 0
    %455 = vmatprep.subr.bf16.mxu0 0
    %456 = vmatpush1.bf16.msra.mxu0 0
    %457 = vmatprep.subr.bf16.mxu0 0
    %458 = vmatpush1.bf16.msra.mxu0 0
    %459 = vmatprep.subr.bf16.mxu0 0
    %460 = vmatpush1.bf16.msra.mxu0 0
    %461 = vmatprep.subr.bf16.mxu0 0
    %462 = vmatpush1.bf16.msra.mxu0 0
    %463 = vmatprep.subr.bf16.mxu0 0
    %464 = vmatpush1.bf16.msra.mxu0 0
    %465 = vmatprep.subr.bf16.mxu0 0
    %466 = vmatpush1.bf16.msra.mxu0 0
    %467 = vmatprep.subr.bf16.mxu0 0
    %468 = vmatpush1.bf16.msra.mxu0 0
    %469 = vmatprep.subr.bf16.mxu0 0
    %470 = vmatpush1.bf16.msra.mxu0 0
    %471 = vmatprep.subr.bf16.mxu0 0
    %472 = vmatpush1.bf16.msra.mxu0 0
    %473 = vmatprep.subr.bf16.mxu0 0
    %474 = vmatpush1.bf16.msra.mxu0 0
    %475 = vmatprep.mubr.bf16.mxu0 0
    %476 = vmatmul.mubr.bf16.gmra.mrb[0].mxu0 %v441
    %v477 = vpop.f32.mrb[0].mxu0
    %v478 = vadd.f32 0.0, %v477
    %v479 = vpop.f32.mrb[0].mxu0
    %v480 = vadd.f32 0.0, %v479
    %v481 = vpop.f32.mrb[0].mxu0
    %v482 = vpop.f32.mrb[0].mxu0
    %483 = vdwg.mxu0
    %v486 = vcombine.low %v478, %v480
    %v488 = vunpack.c.l.s4 1966171168
    %v489 = vunpack.c.0.s8 %v488
    %v490 = vlaneseq
    %v491 = vshrl.u32 %v490, 7
    %v492 = vsub.s32 %v489, %v491
    %v493 = vrot.slane %v486, %v492
    %v495 = vunpack.c.l.s4 1966171168
    %v496 = vunpack.c.0.s8 %v495
    %v497 = vlaneseq
    %v498 = vshrl.u32 %v497, 7
    %v499 = vsub.s32 %v496, %v498
    %v500 = vrot.slane %v493, %v499
    %v502 = vadd.f32 %v411, %v500
    %s503 = sshll.u32 %s228, 4
    %504 = dma.done %s182, %s503
    %v505 = vld [vmem:[#allocation2 + $0x3] sm:$0x1]
    %v506 = vpack.c.bf16 %v505, %v505
    %v507 = vld [vmem:[%s2 + $0x60] sm:$0xff]
    %v508 = vld [vmem:[%s2 + $0x68] sm:$0xff]
    %v509 = vld [vmem:[%s2 + $0x70] sm:$0xff]
    %v510 = vld [vmem:[%s2 + $0x78] sm:$0xff]
    %v515 = vunpack.c.l.b16 %v507
    %v516 = vunpack.c.h.b16 %v507
    %v517 = vunpack.c.l.b16 %v508
    %v518 = vunpack.c.h.b16 %v508
    %v519 = vunpack.c.l.b16 %v509
    %v520 = vunpack.c.h.b16 %v509
    %v521 = vunpack.c.l.b16 %v510
    %v522 = vunpack.c.h.b16 %v510
    %v523 = vpack.c.b16 %v517, %v515
    %v524 = vpack.c.b16 %v518, %v516
    %v525 = vpack.c.b16 %v521, %v519
    %v526 = vpack.c.b16 %v522, %v520
    %v532 = vsel %vm257, %v506, 0
    %534 = vmatprep.subr.bf16.mxu0 %v524
    %535 = vmatpush1.bf16.msra.mxu0 %v523
    %536 = vmatprep.subr.bf16.mxu0 %v526
    %537 = vmatpush1.bf16.msra.mxu0 %v525
    %538 = vmatprep.subr.bf16.mxu0 0
    %539 = vmatpush1.bf16.msra.mxu0 0
    %540 = vmatprep.subr.bf16.mxu0 0
    %541 = vmatpush1.bf16.msra.mxu0 0
    %542 = vmatprep.subr.bf16.mxu0 0
    %543 = vmatpush1.bf16.msra.mxu0 0
    %544 = vmatprep.subr.bf16.mxu0 0
    %545 = vmatpush1.bf16.msra.mxu0 0
    %546 = vmatprep.subr.bf16.mxu0 0
    %547 = vmatpush1.bf16.msra.mxu0 0
    %548 = vmatprep.subr.bf16.mxu0 0
    %549 = vmatpush1.bf16.msra.mxu0 0
    %550 = vmatprep.subr.bf16.mxu0 0
    %551 = vmatpush1.bf16.msra.mxu0 0
    %552 = vmatprep.subr.bf16.mxu0 0
    %553 = vmatpush1.bf16.msra.mxu0 0
    %554 = vmatprep.subr.bf16.mxu0 0
    %555 = vmatpush1.bf16.msra.mxu0 0
    %556 = vmatprep.subr.bf16.mxu0 0
    %557 = vmatpush1.bf16.msra.mxu0 0
    %558 = vmatprep.subr.bf16.mxu0 0
    %559 = vmatpush1.bf16.msra.mxu0 0
    %560 = vmatprep.subr.bf16.mxu0 0
    %561 = vmatpush1.bf16.msra.mxu0 0
    %562 = vmatprep.subr.bf16.mxu0 0
    %563 = vmatpush1.bf16.msra.mxu0 0
    %564 = vmatprep.subr.bf16.mxu0 0
    %565 = vmatpush1.bf16.msra.mxu0 0
    %566 = vmatprep.mubr.bf16.mxu0 0
    %567 = vmatmul.mubr.bf16.gmra.mrb[0].mxu0 %v532
    %v568 = vpop.f32.mrb[0].mxu0
    %v569 = vadd.f32 0.0, %v568
    %v570 = vpop.f32.mrb[0].mxu0
    %v571 = vadd.f32 0.0, %v570
    %v572 = vpop.f32.mrb[0].mxu0
    %v573 = vpop.f32.mrb[0].mxu0
    %574 = vdwg.mxu0
    %v577 = vcombine.low %v569, %v571
    %v579 = vunpack.c.l.s4 1966171168
    %v580 = vunpack.c.0.s8 %v579
    %v581 = vlaneseq
    %v582 = vshrl.u32 %v581, 7
    %v583 = vsub.s32 %v580, %v582
    %v584 = vrot.slane %v577, %v583
    %v586 = vunpack.c.l.s4 1966171168
    %v587 = vunpack.c.0.s8 %v586
    %v588 = vlaneseq
    %v589 = vshrl.u32 %v588, 7
    %v590 = vsub.s32 %v587, %v589
    %v591 = vrot.slane %v584, %v590
    %v593 = vadd.f32 %v502, %v591
    %v594 = vmax.f32 %v593, 0.0
    %v596 = vlaneseq
    %v597 = vshrl.u32 %v596, 7
    %v598 = vsub.s32 0, %v597
    %v599 = vrot.slane %v594, %v598
    %v600 = vlaneseq
    %v601 = vshrl.u32 %v600, 7
    %v602 = vsub.s32 1, %v601
    %v603 = vrot.slane %v594, %v602
    %vm606 = vcmask 1040384
    %v607 = vsel %vm606, %v599, -inf
    %v608 = vsel %vm606, %v603, -inf
    %v609 = vmax.f32 %v607, %v608
    %610 = vmax.xlane.f32.xlu0 %v609
    %v611 = vpop.xlane.xlu0 %610
    %v613 = vlaneseq
    %v614 = vshrl.u32 %v613, 7
    %v615 = vsub.s32 0, %v614
    %v616 = vrot.slane %v611, %v615
    %v618 = vsub.f32 %v594, %v616
    %v619 = vmul.f32 %v618, 1.442695
    %v620 = vpow.pop %v619
    %v622 = vlaneseq
    %v623 = vshrl.u32 %v622, 7
    %v624 = vsub.s32 0, %v623
    %v625 = vrot.slane %v620, %v624
    %v626 = vlaneseq
    %v627 = vshrl.u32 %v626, 7
    %v628 = vsub.s32 1, %v627
    %v629 = vrot.slane %v620, %v628
    %v632 = vsel %vm606, %v625, 0.0
    %v633 = vsel %vm606, %v629, 0.0
    %v634 = vadd.f32 %v632, %v633
    %635 = vadd.xlane.f32.xlu0 %v634
    %v636 = vpop.xlane.xlu0 %635
    %v637 = vlog2.pop %v636
    %v638 = vmul.f32 %v637, 0.6931472
    %v640 = vlaneseq
    %v641 = vshrl.u32 %v640, 7
    %v642 = vsub.s32 0, %v641
    %v643 = vrot.slane %v638, %v642
    %v645 = vsub.f32 %v618, %v643
    %v646 = vlaneseq
    %vm647 = vcmp.ge.s32.totalorder %v646, 0
    %vm648 = vcmp.lt.s32.totalorder %v646, 256
    %vm649 = vmand %vm647, %vm648
    %650 = vst.msk [vmem:[#allocation6] sm:$0x3] %vm649, %v645
    // Predicated region
    $region130: #{tpu_custom_call.1} parent=1 // pred_check
      _
    $region131: #{tpu_custom_call.1} parent=1 // pred_check_branch
      %652 = sbr.rel (0) target = $region133
    $region132: #{tpu_custom_call.1} parent=1 // pred_region
      %s654 = ssub.s32 32, 32
      %655 = vsyncadd [#allocation7], %s654
      %s657 = sshll.u32 [#allocation6], 4
      %s658 = int_to_ptr.vmem [resolvable:$true] %s657
      %660 = dma.vmem_to_hbm [thread:$0]  %s658, 32, %s4, [#allocation7]
    $region133: #{tpu_custom_call.1} parent=1 // pred_fallthru
      _
    // Predicated region
    $region134: #{tpu_custom_call.1} parent=1 // pred_check
      _
    $region135: #{tpu_custom_call.1} parent=1 // pred_check_branch
      %662 = sbr.rel (0) target = $region137
    $region136: #{tpu_custom_call.1} parent=1 // pred_region
      %663 = dma.done [#allocation7], 32
    $region137: #{tpu_custom_call.1} parent=1 // pred_fallthru
      _
    %664 = vsyncpa [#allocation7], 1
  %665 = vsyncmov [#allocation3]
  %s666 = vpop.sfrf %665
  %p667 = scmp.eq.s32.totalorder %s666, 0
  %p668 = pneg %p667
  %670 = shalt.err (%p668)
  %s671 = scalar_lea.sflag [#allocation3], 1
  %672 = vsyncmov %s671
  %s673 = vpop.sfrf %672
  %p674 = scmp.eq.s32.totalorder %s673, 0
  %p675 = pneg %p674
  %677 = shalt.err (%p675)
  %s678 = scalar_lea.sflag [#allocation3], 2
  %679 = vsyncmov %s678
  %s680 = vpop.sfrf %679
  %p681 = scmp.eq.s32.totalorder %s680, 0
  %p682 = pneg %p681
  %684 = shalt.err (%p682)
  %s685 = scalar_lea.sflag [#allocation3], 3
  %686 = vsyncmov %s685
  %s687 = vpop.sfrf %686
  %p688 = scmp.eq.s32.totalorder %s687, 0
  %p689 = pneg %p688
  %691 = shalt.err (%p689)

</llo_original>
